<compile_context>
chip_gen: v7x
topology: tpu7x:2x2x1
jax: 0.10.0
libtpu: 0.0.40
codegen_flags: <defaults>
</compile_context>

<pallas_src>
import functools

import jax
import jax.numpy as jnp
from jax.experimental import pallas as pl
from jax.experimental.pallas import tpu as pltpu


def _pool_fc_kernel(x_ref, w_ref, b_ref, o_ref, acc_ref, *, inv_hw):
    # x_ref: (tB, C, tHW) NCHW chunk (spatial on lanes); w_ref: (C, Npad);
    # b_ref: (1, Npad); o_ref: (tB, Npad); acc_ref: (tB, C) f32 scratch.
    j = pl.program_id(1)

    @pl.when(j == 0)
    def _():
        acc_ref[...] = jnp.zeros_like(acc_ref)

    # AdaptiveAvgPool2d((1,1)): f32-accumulated sum over the spatial (lane) axis.
    acc_ref[...] += jnp.sum(x_ref[...], axis=-1, dtype=jnp.float32)

    @pl.when(j == pl.num_programs(1) - 1)
    def _():
        pooled = acc_ref[...] * jnp.float32(inv_hw)
        logits = jnp.dot(pooled.astype(w_ref.dtype), w_ref[...],
                         preferred_element_type=jnp.float32)
        o_ref[...] = (logits + b_ref[...].astype(jnp.float32)).astype(o_ref.dtype)


def _fc_kernel(x_ref, w_ref, b_ref, o_ref):
    # x_ref: (tB, C); w_ref: (C, Npad); b_ref: (1, Npad); o_ref: (tB, Npad)
    logits = jnp.dot(x_ref[...].astype(w_ref.dtype), w_ref[...],
                     preferred_element_type=jnp.float32)
    o_ref[...] = (logits + b_ref[...].astype(jnp.float32)).astype(o_ref.dtype)


def _round_up(v, m):
    return (v + m - 1) // m * m


def _batch_tile_candidates(batch, cap=128):
    """Batch tiles, largest first; each is either == batch (full) or a multiple of 8."""
    cands = []
    if batch <= cap:
        cands.append(batch)
    t = min((batch // 8) * 8, cap)
    while t >= 8:
        if t < batch and t not in cands:
            cands.append(t)
        t -= 8
    if not cands:
        cands.append(batch)
    return cands


def _choose_pool_tiles(batch, chans, hw, itemsize, budget):
    """Pick (batch_tile, hw_tile) so 2x-buffered x block + f32 widen temp fit budget."""
    bytes_per_elem = 2 * itemsize + 4  # double-buffered input + f32 reduction temp

    def hw_tile_for(tb):
        col = tb * chans * bytes_per_elem
        if hw * col <= budget:
            return hw
        best = 0
        k = 128
        while k < hw:                      # hw tile must divide hw and be 128-aligned
            if hw % k == 0 and k * col <= budget:
                best = k
            k += 128
        return best

    tb_sel, thw_sel = None, None
    for tb in _batch_tile_candidates(batch):
        thw = hw_tile_for(tb)
        if thw:
            tb_sel, thw_sel = tb, thw
            break
    if tb_sel is None:
        # No legal HW tiling fits (e.g. HW has no 128-multiple divisor): take the
        # smallest batch tile with the full spatial extent; vmem_limit is derived
        # from the actual tile below so compilation stays consistent.
        tb_sel, thw_sel = _batch_tile_candidates(batch)[-1], hw
    # v7x megacore: keep >= 2 steps on the parallel (batch) axis when possible.
    if pl.cdiv(batch, tb_sel) == 1 and batch >= 16:
        tb_sel = max(8, _round_up(pl.cdiv(batch, 2), 8))
        thw_sel = hw_tile_for(tb_sel) or thw_sel
    return tb_sel, thw_sel


def _choose_fc_tile(batch, chans, itemsize, budget):
    sel = None
    for tb in _batch_tile_candidates(batch, cap=512):
        if 2 * tb * chans * itemsize <= budget:
            sel = tb
            break
    if sel is None:
        sel = _batch_tile_candidates(batch)[-1]
    if pl.cdiv(batch, sel) == 1 and batch >= 16:
        sel = max(8, _round_up(pl.cdiv(batch, 2), 8))
    return sel


def _vmem_limit(x_bytes, w_bytes, b_bytes, out_tile_bytes, scratch_bytes):
    # x_bytes already includes double-buffering (+ any f32 temp allowance).
    need = x_bytes + 2 * (w_bytes + b_bytes + out_tile_bytes) + scratch_bytes
    need = int(need) + (4 << 20)
    return max(min(need, 100 << 20), 32 << 20)


def logloss_head_forward(x, weight, bias, *, with_avg_pool=False,
                         x_block_budget_bytes=16 << 20):
    """Pallas implementation of LogLossHead.forward.

    Args:
      x: list/tuple of length 1 holding the feature tensor.
         - with_avg_pool=True : (B, C, H, W)  (NCHW)
         - with_avg_pool=False: (B, C) (or any (B, ...) flattening to in_channels)
      weight: (num_classes, in_channels)  -- PyTorch nn.Linear layout.
      bias:   (num_classes,)
      x_block_budget_bytes: per-input-block VMEM budget (16 MiB is v7x-safe;
        ~32-48 MiB is a good choice on v5e/v6e with 128 MiB VMEM).
    Returns:
      cls_score: (B, num_classes), dtype of x.
    """
    assert isinstance(x, (tuple, list)) and len(x) == 1
    x = x[0]
    num_classes, in_channels = weight.shape
    out_dtype = x.dtype
    out_itemsize = jnp.dtype(out_dtype).itemsize

    # Lane-dense output: pad classes to a multiple of 128; zero rows/cols keep
    # the padded logits exactly 0, sliced off at the end.
    n_pad = _round_up(num_classes, 128)
    if n_pad != num_classes:
        weight = jnp.pad(weight, ((0, n_pad - num_classes), (0, 0)))
        bias = jnp.pad(bias, (0, n_pad - num_classes))
    # One-time transpose of the small weight to (C, Npad): the MXU contraction
    # on C then needs no per-grid-step transpose of the resident weight block.
    w_t = weight.T
    b2 = bias.reshape(1, n_pad)

    w_bytes = w_t.size * w_t.dtype.itemsize
    b_bytes = 8 * n_pad * b2.dtype.itemsize  # (1, Npad) pads to 8 sublanes in VMEM

    if with_avg_pool:
        assert x.ndim == 4, f"Tensor must have 4 dims, got: {x.ndim}"
        B, C, H, W = x.shape
        assert C == in_channels
        HW = H * W
        # NCHW -> (B, C, HW) is a free reshape (no transpose, no extra HBM pass);
        # the spatial axis sits on lanes and is pooled by an XLU lane reduction.
        x3 = x.reshape(B, C, HW)
        itemsize = x3.dtype.itemsize

        tb, thw = _choose_pool_tiles(B, C, HW, itemsize, x_block_budget_bytes)
        grid = (pl.cdiv(B, tb), HW // thw)

        x_tile_bytes = tb * C * thw * itemsize
        f32_tmp_bytes = tb * C * thw * 4
        out_tile_bytes = tb * n_pad * out_itemsize
        acc_bytes = tb * C * 4
        vmem_limit = _vmem_limit(2 * x_tile_bytes + f32_tmp_bytes,
                                 w_bytes, b_bytes, out_tile_bytes, acc_bytes)

        cost = pl.CostEstimate(
            flops=int(B * C * HW + 2 * B * C * n_pad + B * n_pad),
            transcendentals=0,
            bytes_accessed=int(x3.size * itemsize
                               + w_t.size * w_t.dtype.itemsize
                               + n_pad * b2.dtype.itemsize
                               + B * n_pad * out_itemsize))

        kernel = functools.partial(_pool_fc_kernel, inv_hw=1.0 / HW)
        out = pl.pallas_call(
            kernel,
            out_shape=jax.ShapeDtypeStruct((B, n_pad), out_dtype),
            grid=grid,
            in_specs=[
                pl.BlockSpec((tb, C, thw), lambda i, j: (i, 0, j)),
                pl.BlockSpec((in_channels, n_pad), lambda i, j: (0, 0)),
                pl.BlockSpec((1, n_pad), lambda i, j: (0, 0)),
            ],
            out_specs=pl.BlockSpec((tb, n_pad), lambda i, j: (i, 0)),
            scratch_shapes=[pltpu.VMEM((tb, C), jnp.float32)],
            compiler_params=pltpu.CompilerParams(
                dimension_semantics=("parallel", "arbitrary"),
                vmem_limit_bytes=vmem_limit),
            cost_estimate=cost,
        )(x3, w_t, b2)
    else:
        # x.view(x.size(0), -1)
        B = x.shape[0]
        x2 = x.reshape(B, -1)
        C = x2.shape[1]
        assert C == in_channels
        itemsize = x2.dtype.itemsize

        tb = _choose_fc_tile(B, C, itemsize, x_block_budget_bytes)
        grid = (pl.cdiv(B, tb),)

        x_tile_bytes = tb * C * itemsize
        out_tile_bytes = tb * n_pad * out_itemsize
        vmem_limit = _vmem_limit(2 * x_tile_bytes, w_bytes, b_bytes,
                                 out_tile_bytes, 0)

        cost = pl.CostEstimate(
            flops=int(2 * B * C * n_pad + B * n_pad),
            transcendentals=0,
            bytes_accessed=int(x2.size * itemsize
                               + w_t.size * w_t.dtype.itemsize
                               + n_pad * b2.dtype.itemsize
                               + B * n_pad * out_itemsize))

        out = pl.pallas_call(
            _fc_kernel,
            out_shape=jax.ShapeDtypeStruct((B, n_pad), out_dtype),
            grid=grid,
            in_specs=[
                pl.BlockSpec((tb, C), lambda i: (i, 0)),
                pl.BlockSpec((in_channels, n_pad), lambda i: (0, 0)),
                pl.BlockSpec((1, n_pad), lambda i: (0, 0)),
            ],
            out_specs=pl.BlockSpec((tb, n_pad), lambda i: (i, 0)),
            compiler_params=pltpu.CompilerParams(
                dimension_semantics=("parallel",),
                vmem_limit_bytes=vmem_limit),
            cost_estimate=cost,
        )(x2, w_t, b2)

    if n_pad != num_classes:
        out = out[:, :num_classes]
    return out


if __name__ == "__main__":
    # Deterministic small setup (encoder.fc = nn.Linear(in_channels, num_classes)).
    B, C, H, W = 2, 32, 16, 16
    num_classes = 10  # non-multiple of 128: exercises the lane-padding path

    key = jax.random.PRNGKey(0)
    kx, kw, kb = jax.random.split(key, 3)

    x = jax.random.normal(kx, (B, C, H, W), dtype=jnp.float32)

    # Deterministic nn.Linear-style init: U(-1/sqrt(in), 1/sqrt(in)).
    bound = 1.0 / jnp.sqrt(jnp.float32(C))
    weight = jax.random.uniform(kw, (num_classes, C), jnp.float32, -bound, bound)
    bias = jax.random.uniform(kb, (num_classes,), jnp.float32, -bound, bound)

    # with_avg_pool=True path: pool -> flatten -> fc, all inside the kernel.
    cls_score = logloss_head_forward([x], weight, bias, with_avg_pool=True)
    cls_score = jax.block_until_ready(cls_score)
    ref = x.mean(axis=(2, 3)) @ weight.T + bias
    assert cls_score.shape == (B, num_classes)
    assert jnp.allclose(cls_score, ref, atol=1e-3, rtol=1e-3), \
        float(jnp.abs(cls_score - ref).max())

    # Pooling path again with a tiny budget to force HW tiling (exercises the
    # hw grid axis + scratch accumulator across multiple steps).
    B2, H2, W2 = 8, 16, 32
    x_b = jax.random.normal(kx, (B2, C, H2, W2), dtype=jnp.float32)
    cls_score_b = logloss_head_forward([x_b], weight, bias, with_avg_pool=True,
                                       x_block_budget_bytes=1 << 20)
    cls_score_b = jax.block_until_ready(cls_score_b)
    ref_b = x_b.mean(axis=(2, 3)) @ weight.T + bias
    assert cls_score_b.shape == (B2, num_classes)
    assert jnp.allclose(cls_score_b, ref_b, atol=1e-3, rtol=1e-3), \
        float(jnp.abs(cls_score_b - ref_b).max())

    # with_avg_pool=False path: flat features -> fc.
    x_flat = jax.random.normal(kx, (B, C), dtype=jnp.float32)
    cls_score2 = logloss_head_forward([x_flat], weight, bias, with_avg_pool=False)
    cls_score2 = jax.block_until_ready(cls_score2)
    ref2 = x_flat @ weight.T + bias
    assert cls_score2.shape == (B, num_classes)
    assert jnp.allclose(cls_score2, ref2, atol=1e-3, rtol=1e-3), \
        float(jnp.abs(cls_score2 - ref2).max())

    print("KERNEL_OK")
</pallas_src>

<mosaic_0001>
module attributes {stable_mosaic.version = 11 : i64} {
  func.func @_pool_fc_kernel(%arg0: i32, %arg1: i32, %arg2: memref<2x32x256xf32, #tpu.memory_space<vmem>>, %arg3: memref<32x128xf32, #tpu.memory_space<vmem>>, %arg4: memref<1x128xf32, #tpu.memory_space<vmem>>, %arg5: memref<2x128xf32, #tpu.memory_space<vmem>>, %arg6: memref<2x32xf32, #tpu.memory_space<vmem>>) attributes {dimension_semantics = [#tpu.dimension_semantics<parallel>, #tpu.dimension_semantics<arbitrary>], iteration_bounds = array<i64: 1, 1>, scalar_prefetch = 0 : i64, scratch_operands = 1 : i64, tpu.core_type = #tpu.core_type<tc>, window_params = [{transform_indices = @transform_0, window_bounds = array<i64: 2, 32, 256>}, {pipeline_mode = #tpu.pipeline_mode<synchronous>, transform_indices = @transform_1, window_bounds = array<i64: 32, 128>}, {pipeline_mode = #tpu.pipeline_mode<synchronous>, transform_indices = @transform_2, window_bounds = array<i64: 1, 128>}, {transform_indices = @transform_3, window_bounds = array<i64: 2, 128>}]} {
    %c0_i32 = arith.constant 0 : i32
    %0 = arith.cmpi eq, %arg1, %c0_i32 : i32
    %1 = arith.extui %0 : i1 to i32
    %c0_i32_0 = arith.constant 0 : i32
    %2 = arith.cmpi ne, %1, %c0_i32_0 : i32
    scf.if %2 {
      %cst_9 = arith.constant 0.000000e+00 : f32
      %11 = vector.broadcast %cst_9 : f32 to vector<2x32xf32>
      %c0_10 = arith.constant 0 : index
      %c0_11 = arith.constant 0 : index
      %12 = vector.load %arg6[%c0_10, %c0_11] : memref<2x32xf32, #tpu.memory_space<vmem>>, vector<2x32xf32>
      tpu.vector_store %arg6[%c0_10, %c0_11], %11 {strides = array<i32>} : memref<2x32xf32, #tpu.memory_space<vmem>>, vector<2x32xf32>,
    } else {
    }
    %c0 = arith.constant 0 : index
    %c0_1 = arith.constant 0 : index
    %3 = vector.load %arg6[%c0, %c0_1] : memref<2x32xf32, #tpu.memory_space<vmem>>, vector<2x32xf32>
    %c0_2 = arith.constant 0 : index
    %c0_3 = arith.constant 0 : index
    %c0_4 = arith.constant 0 : index
    %4 = vector.load %arg2[%c0_2, %c0_3, %c0_4] : memref<2x32x256xf32, #tpu.memory_space<vmem>>, vector<2x32x256xf32>
    %cst = arith.constant dense<0.000000e+00> : vector<2x32xf32>
    %5 = vector.multi_reduction <add>, %4, %cst [2] : vector<2x32x256xf32> to vector<2x32xf32>
    %6 = arith.addf %3, %5 : vector<2x32xf32>
    %c0_5 = arith.constant 0 : index
    %c0_6 = arith.constant 0 : index
    %7 = vector.load %arg6[%c0_5, %c0_6] : memref<2x32xf32, #tpu.memory_space<vmem>>, vector<2x32xf32>
    tpu.vector_store %arg6[%c0_5, %c0_6], %6 {strides = array<i32>} : memref<2x32xf32, #tpu.memory_space<vmem>>, vector<2x32xf32>,
    %c0_i32_7 = arith.constant 0 : i32
    %8 = arith.cmpi eq, %arg1, %c0_i32_7 : i32
    %9 = arith.extui %8 : i1 to i32
    %c0_i32_8 = arith.constant 0 : i32
    %10 = arith.cmpi ne, %9, %c0_i32_8 : i32
    scf.if %10 {
      %c0_9 = arith.constant 0 : index
      %c0_10 = arith.constant 0 : index
      %11 = vector.load %arg6[%c0_9, %c0_10] : memref<2x32xf32, #tpu.memory_space<vmem>>, vector<2x32xf32>
      %cst_11 = arith.constant 3.906250e-03 : f32
      %12 = vector.broadcast %cst_11 : f32 to vector<2x32xf32>
      %13 = arith.mulf %11, %12 : vector<2x32xf32>
      %c0_12 = arith.constant 0 : index
      %c0_13 = arith.constant 0 : index
      %14 = vector.load %arg3[%c0_12, %c0_13] : memref<32x128xf32, #tpu.memory_space<vmem>>, vector<32x128xf32>
      %cst_14 = arith.constant dense<0.000000e+00> : vector<2x128xf32>
      %15 = tpu.matmul %13, %14, %cst_14 {dimension_numbers = #tpu.dot_dimension_numbers<[1], [0], [0], [1], [0, 0, 1, 1], [], []>} : vector<2x32xf32>, vector<32x128xf32>, vector<2x128xf32> -> vector<2x128xf32>
      %c0_15 = arith.constant 0 : index
      %c0_16 = arith.constant 0 : index
      %16 = vector.load %arg4[%c0_15, %c0_16] : memref<1x128xf32, #tpu.memory_space<vmem>>, vector<1x128xf32>
      %17 = vector.broadcast %16 : vector<1x128xf32> to vector<2x128xf32>
      %18 = arith.addf %15, %17 : vector<2x128xf32>
      %c0_17 = arith.constant 0 : index
      %c0_18 = arith.constant 0 : index
      %19 = vector.load %arg5[%c0_17, %c0_18] : memref<2x128xf32, #tpu.memory_space<vmem>>, vector<2x128xf32>
      tpu.vector_store %arg5[%c0_17, %c0_18], %18 {strides = array<i32>} : memref<2x128xf32, #tpu.memory_space<vmem>>, vector<2x128xf32>,
    } else {
    }
    return
  }
  func.func @transform_0(%arg0: i32, %arg1: i32) -> (i32, i32, i32) {
    %c0_i32 = arith.constant 0 : i32
    %c0_i32_0 = arith.constant 0 : i32
    return %arg0, %c0_i32, %arg1 : i32, i32, i32
  }
  func.func @transform_1(%arg0: i32, %arg1: i32) -> (i32, i32) {
    %c0_i32 = arith.constant 0 : i32
    %c0_i32_0 = arith.constant 0 : i32
    %c0_i32_1 = arith.constant 0 : i32
    return %c0_i32, %c0_i32_0 : i32, i32
  }
  func.func @transform_2(%arg0: i32, %arg1: i32) -> (i32, i32) {
    %c0_i32 = arith.constant 0 : i32
    %c0_i32_0 = arith.constant 0 : i32
    %c0_i32_1 = arith.constant 0 : i32
    return %c0_i32, %c0_i32_0 : i32, i32
  }
  func.func @transform_3(%arg0: i32, %arg1: i32) -> (i32, i32) {
    %c0_i32 = arith.constant 0 : i32
    %c0_i32_0 = arith.constant 0 : i32
    return %arg0, %c0_i32 : i32, i32
  }
}

</mosaic_0001>

<llo_original>
// kernel: tpu_custom_call.1
$region0: #{tpu_custom_call.1}
  #allocation0 [shape = 'u32[]', space=smem, size = 0x4, offset = 0x4, fixed_abs, tag = 'smem constant byte address 0x4 - core index']
  #allocation1 [shape = 'u32[144,128]{1,0:T(1,128)}', space=vmem, size = 0x12000, scoped, tag = 'internal scratch']
  #allocation2 [shape = 'f32[2,32]{1,0:T(2,128)}', space=vmem, size = 0x400, scoped, tag = 'scratch operand']
  %s0 = inlined_call_operand.hbm [shape: f32[2,32,256], index: 0, kind: input, shape index: {}]
  %s1 = inlined_call_operand.hbm [shape: f32[32,128], index: 1, kind: input, shape index: {}]
  %s2 = inlined_call_operand.vmem [shape: f32[1,128], index: 2, kind: input, shape index: {}]
  %s3 = inlined_call_operand.hbm [shape: f32[2,128], index: 3, kind: output, shape index: {}]
  %s4 = sld [smem:[#allocation0]]
  $region38: #{tpu_custom_call.1} parent=0
    _
  %s6 = ssub.s32 1, %s4
  %s7 = scalar_select 0, %s6, %s4
  $region1: #{tpu_custom_call.1} parent=0
    #allocation3 [shape = 'u8[65536]{0}', space=vmem, size = 0x10000, scoped, tag = 'input window, operand 0, single buffered']
    #allocation4 [shape = 's32[1]{0}', space=sflag, size = 0x4, scoped, tag = 'scoped memory for tpu_custom_call.1']
    #allocation5 [shape = 's32[1]{0}', space=sflag, size = 0x4, scoped, tag = 'scoped memory for tpu_custom_call.1']
    #allocation6 [shape = 'u8[16384]{0}', space=vmem, size = 0x4000, scoped, tag = 'input window, operand 1, single buffered']
    #allocation7 [shape = 's32[1]{0}', space=sflag, size = 0x4, scoped, tag = 'scoped memory for tpu_custom_call.1']
    #allocation8 [shape = 'u8[1024]{0}', space=vmem, size = 0x400, scoped, tag = 'output window, operand 0, single buffered']
    %8 = vsyncpa [#allocation4], 0
    %9 = vsyncpa [#allocation7], 0
    %10 = vsyncpa [#allocation5], 0
    // Predicated region
    $region2: #{tpu_custom_call.1} parent=1 // pred_check
      _
    $region3: #{tpu_custom_call.1} parent=1 // pred_check_branch
      %12 = sbr.rel (0) target = $region5
    $region4: #{tpu_custom_call.1} parent=1 // pred_region
      %s14 = ssub.s32 2048, 2048
      %15 = vsyncadd [#allocation4], %s14
      %s16 = sshll.u32 [#allocation3], 4
      %s17 = int_to_ptr.vmem [resolvable:$true] %s16
      %22 = dma.hbm_to_vmem [thread:$0]  %s0, 2048, %s17, [#allocation4], 256, 256, 16
    $region5: #{tpu_custom_call.1} parent=1 // pred_fallthru
      _
    // Predicated region
    $region6: #{tpu_custom_call.1} parent=1 // pred_check
      _
    $region7: #{tpu_custom_call.1} parent=1 // pred_check_branch
      %24 = sbr.rel (0) target = $region9
    $region8: #{tpu_custom_call.1} parent=1 // pred_region
      %s26 = ssub.s32 512, 512
      %27 = vsyncadd [#allocation7], %s26
      %s28 = sshll.u32 [#allocation6], 4
      %s29 = int_to_ptr.vmem [resolvable:$true] %s28
      %34 = dma.hbm_to_vmem [thread:$0]  %s1, 512, %s29, [#allocation7], 128, 128, 8
    $region9: #{tpu_custom_call.1} parent=1 // pred_fallthru
      _
    // Predicated region
    $region10: #{tpu_custom_call.1} parent=1 // pred_check
      _
    $region11: #{tpu_custom_call.1} parent=1 // pred_check_branch
      %36 = sbr.rel (0) target = $region13
    $region12: #{tpu_custom_call.1} parent=1 // pred_region
      _
    $region13: #{tpu_custom_call.1} parent=1 // pred_fallthru
      _
    // Predicated region
    $region14: #{tpu_custom_call.1} parent=1 // pred_check
      _
    $region15: #{tpu_custom_call.1} parent=1 // pred_check_branch
      %38 = sbr.rel (0) target = $region17
    $region16: #{tpu_custom_call.1} parent=1 // pred_region
      %39 = dma.done [#allocation4], 2048
    $region17: #{tpu_custom_call.1} parent=1 // pred_fallthru
      _
    // Predicated region
    $region18: #{tpu_custom_call.1} parent=1 // pred_check
      _
    $region19: #{tpu_custom_call.1} parent=1 // pred_check_branch
      %41 = sbr.rel (0) target = $region21
    $region20: #{tpu_custom_call.1} parent=1 // pred_region
      %42 = dma.done [#allocation7], 512
    $region21: #{tpu_custom_call.1} parent=1 // pred_fallthru
      _
    %p43 = scmp.eq.s32.totalorder 0, 0
    // Predicated region
    $region22: #{tpu_custom_call.1} parent=1 // pred_check
      %p44 = pneg %p43
    $region23: #{tpu_custom_call.1} parent=1 // pred_check_branch
      %46 = sbr.rel (%p44) target = $region25
    $region24: #{tpu_custom_call.1} parent=1 // pred_region
      %vm47 = vcmask 254976
      %48 = vst.msk [vmem:[#allocation2] sm:$0x3] %vm47, 0.0
    $region25: #{tpu_custom_call.1} parent=1 // pred_fallthru
      _
    %v49 = vld [vmem:[#allocation2] sm:$0x3]
    %v50 = vld [vmem:[#allocation3] sm:$0xff]
    %v51 = vld [vmem:[#allocation3 + $0x8] sm:$0xff]
    %v52 = vld [vmem:[#allocation3 + $0x10] sm:$0xff]
    %v53 = vld [vmem:[#allocation3 + $0x18] sm:$0xff]
    %v54 = vld [vmem:[#allocation3 + $0x20] sm:$0xff]
    %v55 = vld [vmem:[#allocation3 + $0x28] sm:$0xff]
    %v56 = vld [vmem:[#allocation3 + $0x30] sm:$0xff]
    %v57 = vld [vmem:[#allocation3 + $0x38] sm:$0xff]
    %v58 = vld [vmem:[#allocation3 + $0x40] sm:$0xff]
    %v59 = vld [vmem:[#allocation3 + $0x48] sm:$0xff]
    %v60 = vld [vmem:[#allocation3 + $0x50] sm:$0xff]
    %v61 = vld [vmem:[#allocation3 + $0x58] sm:$0xff]
    %v62 = vld [vmem:[#allocation3 + $0x60] sm:$0xff]
    %v63 = vld [vmem:[#allocation3 + $0x68] sm:$0xff]
    %v64 = vld [vmem:[#allocation3 + $0x70] sm:$0xff]
    %v65 = vld [vmem:[#allocation3 + $0x78] sm:$0xff]
    %v66 = vadd.f32 %v50, %v51
    %67 = vadd.xlane.f32.xlu0 %v66
    %v68 = vpop.xlane.xlu0 %67
    %v69 = vadd.f32 %v52, %v53
    %70 = vadd.xlane.f32.xlu0 %v69
    %v71 = vpop.xlane.xlu0 %70
    %v72 = vadd.f32 %v54, %v55
    %73 = vadd.xlane.f32.xlu0 %v72
    %v74 = vpop.xlane.xlu0 %73
    %v75 = vadd.f32 %v56, %v57
    %76 = vadd.xlane.f32.xlu0 %v75
    %v77 = vpop.xlane.xlu0 %76
    %v78 = vadd.f32 %v58, %v59
    %79 = vadd.xlane.f32.xlu0 %v78
    %v80 = vpop.xlane.xlu0 %79
    %v81 = vadd.f32 %v60, %v61
    %82 = vadd.xlane.f32.xlu0 %v81
    %v83 = vpop.xlane.xlu0 %82
    %v84 = vadd.f32 %v62, %v63
    %85 = vadd.xlane.f32.xlu0 %v84
    %v86 = vpop.xlane.xlu0 %85
    %v87 = vadd.f32 %v64, %v65
    %88 = vadd.xlane.f32.xlu0 %v87
    %v89 = vpop.xlane.xlu0 %88
    %v98 = vlaneseq
    %v99 = vand.u32 %v98, 127
    %v100 = vlaneseq
    %v101 = vshrl.u32 %v100, 7
    %v102 = vsub.s32 %v99, %v101
    %v103 = vrot.slane %v68, %v102
    %v104 = vadd.s32 %v99, 4294967288
    %v105 = vlaneseq
    %v106 = vshrl.u32 %v105, 7
    %v107 = vsub.s32 %v104, %v106
    %v108 = vrot.slane %v71, %v107
    %vm109 = vcmask 130112
    %v110 = vsel %vm109, %v108, %v103
    %v111 = vadd.s32 %v99, 4294967280
    %v112 = vlaneseq
    %v113 = vshrl.u32 %v112, 7
    %v114 = vsub.s32 %v111, %v113
    %v115 = vrot.slane %v74, %v114
    %vm116 = vcmask 195712
    %v117 = vsel %vm116, %v115, %v110
    %v118 = vadd.s32 %v99, 4294967272
    %v119 = vlaneseq
    %v120 = vshrl.u32 %v119, 7
    %v121 = vsub.s32 %v118, %v120
    %v122 = vrot.slane %v77, %v121
    %vm123 = vcmask 261312
    %v124 = vsel %vm123, %v122, %v117
    %v125 = vlaneseq
    %v126 = vshrl.u32 %v125, 7
    %v127 = vsub.s32 %v99, %v126
    %v128 = vrot.slane %v80, %v127
    %v129 = vlaneseq
    %v130 = vshrl.u32 %v129, 7
    %v131 = vsub.s32 %v104, %v130
    %v132 = vrot.slane %v83, %v131
    %v133 = vsel %vm109, %v132, %v128
    %v134 = vlaneseq
    %v135 = vshrl.u32 %v134, 7
    %v136 = vsub.s32 %v111, %v135
    %v137 = vrot.slane %v86, %v136
    %v138 = vsel %vm116, %v137, %v133
    %v139 = vlaneseq
    %v140 = vshrl.u32 %v139, 7
    %v141 = vsub.s32 %v118, %v140
    %v142 = vrot.slane %v89, %v141
    %v143 = vsel %vm123, %v142, %v138
    %vm144 = vcmask 1041409
    %v145 = vsel %vm144, %v143, %v124
    %v147 = vadd.f32 %v49, %v145
    %vm148 = vcmask 254976
    %149 = vst.msk [vmem:[#allocation2] sm:$0x3] %vm148, %v147
    // Predicated region
    $region26: #{tpu_custom_call.1} parent=1 // pred_check
      %p150 = pneg %p43
    $region27: #{tpu_custom_call.1} parent=1 // pred_check_branch
      %152 = sbr.rel (%p150) target = $region29
    $region28: #{tpu_custom_call.1} parent=1 // pred_region
      %v153 = vld [vmem:[#allocation2] sm:$0x3]
      %v154 = vmul.f32 %v153, 0.00390625
      %v155 = vld [vmem:[#allocation6] sm:$0xff]
      %v156 = vld [vmem:[#allocation6 + $0x8] sm:$0xff]
      %v157 = vld [vmem:[#allocation6 + $0x10] sm:$0xff]
      %v158 = vld [vmem:[#allocation6 + $0x18] sm:$0xff]
      %v159 = vld [vmem:[%s2] sm:$0x1]
      %v161 = vlaneseq
      %v162 = vshrl.u32 %v161, 7
      %v163 = vsub.s32 0, %v162
      %v164 = vrot.slane %v159, %v163
      %vm166 = vcmask 261120
      %v168 = vsel %vm166, %v154, 0
      %170 = vmatprep.subr.mxu0 0.0
      %171 = vmatpush1.msra.mxu0 %v155
      %172 = vmatprep.subr.mxu0 0.0
      %173 = vmatpush1.msra.mxu0 %v156
      %174 = vmatprep.subr.mxu0 0.0
      %175 = vmatpush1.msra.mxu0 %v157
      %176 = vmatprep.subr.mxu0 0.0
      %177 = vmatpush1.msra.mxu0 %v158
      %178 = vmatprep.subr.mxu0 0.0
      %179 = vmatpush1.msra.mxu0 0.0
      %180 = vmatprep.subr.mxu0 0.0
      %181 = vmatpush1.msra.mxu0 0.0
      %182 = vmatprep.subr.mxu0 0.0
      %183 = vmatpush1.msra.mxu0 0.0
      %184 = vmatprep.subr.mxu0 0.0
      %185 = vmatpush1.msra.mxu0 0.0
      %186 = vmatprep.subr.mxu0 0.0
      %187 = vmatpush1.msra.mxu0 0.0
      %188 = vmatprep.subr.mxu0 0.0
      %189 = vmatpush1.msra.mxu0 0.0
      %190 = vmatprep.subr.mxu0 0.0
      %191 = vmatpush1.msra.mxu0 0.0
      %192 = vmatprep.subr.mxu0 0.0
      %193 = vmatpush1.msra.mxu0 0.0
      %194 = vmatprep.subr.mxu0 0.0
      %195 = vmatpush1.msra.mxu0 0.0
      %196 = vmatprep.subr.mxu0 0.0
      %197 = vmatpush1.msra.mxu0 0.0
      %198 = vmatprep.subr.mxu0 0.0
      %199 = vmatpush1.msra.mxu0 0.0
      %200 = vmatprep.subr.mxu0 0.0
      %201 = vmatpush1.msra.mxu0 0.0
      %202 = vmatprep.subr.mxu0 0.0
      %203 = vmatpush1.msra.mxu0 0.0
      %204 = vmatprep.subr.mxu0 0.0
      %205 = vmatpush1.msra.mxu0 0.0
      %206 = vmatprep.subr.mxu0 0.0
      %207 = vmatpush1.msra.mxu0 0.0
      %208 = vmatprep.subr.mxu0 0.0
      %209 = vmatpush1.msra.mxu0 0.0
      %210 = vmatprep.subr.mxu0 0.0
      %211 = vmatpush1.msra.mxu0 0.0
      %212 = vmatprep.subr.mxu0 0.0
      %213 = vmatpush1.msra.mxu0 0.0
      %214 = vmatprep.subr.mxu0 0.0
      %215 = vmatpush1.msra.mxu0 0.0
      %216 = vmatprep.subr.mxu0 0.0
      %217 = vmatpush1.msra.mxu0 0.0
      %218 = vmatprep.subr.mxu0 0.0
      %219 = vmatpush1.msra.mxu0 0.0
      %220 = vmatprep.subr.mxu0 0.0
      %221 = vmatpush1.msra.mxu0 0.0
      %222 = vmatprep.subr.mxu0 0.0
      %223 = vmatpush1.msra.mxu0 0.0
      %224 = vmatprep.subr.mxu0 0.0
      %225 = vmatpush1.msra.mxu0 0.0
      %226 = vmatprep.subr.mxu0 0.0
      %227 = vmatpush1.msra.mxu0 0.0
      %228 = vmatprep.subr.mxu0 0.0
      %229 = vmatpush1.msra.mxu0 0.0
      %230 = vmatprep.subr.mxu0 0.0
      %231 = vmatpush1.msra.mxu0 0.0
      %232 = vmatprep.subr.mxu0 0.0
      %233 = vmatpush1.msra.mxu0 0.0
      %234 = vmatprep.mubr.f32.mxu0 0.0
      %235 = vmatmul.mubr.f32.gmra.mrb[0].mxu0 %v168
      %v236 = vpop.f32.mrb[0].mxu0
      %v237 = vadd.f32 %v164, %v236
      %v238 = vpop.f32.mrb[0].mxu0
      %239 = vdwg.mxu0
      %240 = vst [vmem:[#allocation8] sm:$0x3] %v237
    $region29: #{tpu_custom_call.1} parent=1 // pred_fallthru
      _
    // Predicated region
    $region30: #{tpu_custom_call.1} parent=1 // pred_check
      _
    $region31: #{tpu_custom_call.1} parent=1 // pred_check_branch
      %242 = sbr.rel (0) target = $region33
    $region32: #{tpu_custom_call.1} parent=1 // pred_region
      %s244 = ssub.s32 32, 32
      %245 = vsyncadd [#allocation5], %s244
      %s247 = sshll.u32 [#allocation8], 4
      %s248 = int_to_ptr.vmem [resolvable:$true] %s247
      %250 = dma.vmem_to_hbm [thread:$0]  %s248, 32, %s3, [#allocation5]
    $region33: #{tpu_custom_call.1} parent=1 // pred_fallthru
      _
    // Predicated region
    $region34: #{tpu_custom_call.1} parent=1 // pred_check
      _
    $region35: #{tpu_custom_call.1} parent=1 // pred_check_branch
      %252 = sbr.rel (0) target = $region37
    $region36: #{tpu_custom_call.1} parent=1 // pred_region
      %253 = dma.done [#allocation5], 32
    $region37: #{tpu_custom_call.1} parent=1 // pred_fallthru
      _
    %254 = vsyncpa [#allocation4], 1
    %255 = vsyncpa [#allocation7], 1
    %256 = vsyncpa [#allocation5], 1

</llo_original>
